<compile_context>
chip_gen: v7x
topology: tpu7x:2x2x1
jax: 0.10.0
libtpu: 0.0.40
codegen_flags: <defaults>
</compile_context>

<pallas_src>
import jax
import jax.numpy as jnp
from jax.experimental import pallas as pl
from jax.experimental.pallas import tpu as pltpu

LANE = 128


def _round_up(x, m):
    return (x + m - 1) // m * m


def policy_mlp_kernel(x_ref, w1_ref, b1_ref, w2_ref, b2_ref, w3_ref, b3_ref,
                      o_ref):
    # x: (TB, K_PAD) bf16 | w*: bf16 | b*: f32 | o: (TB, OUT_PAD) f32
    x = x_ref[...]

    # Layer 1: Linear (bf16 operands, f32 accumulate) + bias + ReLU in f32.
    h1 = jnp.dot(x, w1_ref[...], preferred_element_type=jnp.float32)
    h1 = jnp.maximum(h1 + b1_ref[...], 0.0)

    # Layer 2: Linear + ReLU.
    h2 = jnp.dot(h1.astype(jnp.bfloat16), w2_ref[...],
                 preferred_element_type=jnp.float32)
    h2 = jnp.maximum(h2 + b2_ref[...], 0.0)

    # Layer 3: Linear + Tanh, written as a lane-dense (TB, OUT_PAD) slab.
    out = jnp.dot(h2.astype(jnp.bfloat16), w3_ref[...],
                  preferred_element_type=jnp.float32)
    o_ref[...] = jnp.tanh(out + b3_ref[...]).astype(o_ref.dtype)


def policy_network_forward(state, params, action_dim, *, tb=128):
    """state: (B, state_dim) f32; params: padded bf16 weights / f32 biases.

    tb: batch tile. 128 fills v5e's 128-wide MXU rows; use a multiple of 256
    on v6e/v7x for large batches (weights are ~300 KB bf16, so VMEM is never
    the constraint here).
    """
    B, state_dim = state.shape
    w1, b1 = params["w1"], params["b1"]
    w2, b2 = params["w2"], params["b2"]
    w3, b3 = params["w3"], params["b3"]
    k_pad, hidden = w1.shape
    out_pad = w3.shape[1]

    # Pad batch to a multiple of tb and features to the lane-padded K, casting
    # the matmul operand to bf16 (accumulation remains f32 in the kernel).
    b_pad = _round_up(B, tb)
    x = jnp.zeros((b_pad, k_pad), jnp.bfloat16)
    x = x.at[:B, :state_dim].set(state.astype(jnp.bfloat16))

    grid = (b_pad // tb,)

    flops = 2 * b_pad * (k_pad * hidden + hidden * hidden + hidden * out_pad)
    bytes_accessed = (
        x.size * 2                                   # bf16 activations in
        + (w1.size + w2.size + w3.size) * 2          # bf16 weights
        + (b1.size + b2.size + b3.size) * 4          # f32 biases
        + b_pad * out_pad * 4                        # f32 output slab
    )

    out = pl.pallas_call(
        policy_mlp_kernel,
        out_shape=jax.ShapeDtypeStruct((b_pad, out_pad), jnp.float32),
        grid=grid,
        in_specs=[
            pl.BlockSpec((tb, k_pad), lambda i: (i, 0)),   # batch-tiled input
            pl.BlockSpec(w1.shape, lambda i: (0, 0)),      # weights stay put
            pl.BlockSpec(b1.shape, lambda i: (0, 0)),
            pl.BlockSpec(w2.shape, lambda i: (0, 0)),
            pl.BlockSpec(b2.shape, lambda i: (0, 0)),
            pl.BlockSpec(w3.shape, lambda i: (0, 0)),
            pl.BlockSpec(b3.shape, lambda i: (0, 0)),
        ],
        out_specs=pl.BlockSpec((tb, out_pad), lambda i: (i, 0)),
        compiler_params=pltpu.CompilerParams(
            dimension_semantics=("parallel",)),
        cost_estimate=pl.CostEstimate(
            flops=flops,
            transcendentals=b_pad * out_pad,
            bytes_accessed=bytes_accessed),
    )(x, w1, b1, w2, b2, w3, b3)

    return out[:B, :action_dim]


def init_params(key, state_dim, action_dim, hidden_dim):
    """PyTorch nn.Linear-style init (U(-1/sqrt(fan_in), +)), then pad + cast.

    Returns (kernel_params, ref_params): kernel_params has zero-padded bf16
    weights (w1 rows -> 128-lane K, w3/b3 cols -> 128-lane output slab);
    ref_params keeps the unpadded f32 weights for the correctness check.
    """
    keys = jax.random.split(key, 6)
    k_pad = _round_up(state_dim, LANE)
    out_pad = _round_up(action_dim, LANE)

    def linear(kw, kb, fan_in, fan_out):
        bound = 1.0 / jnp.sqrt(jnp.float32(fan_in))
        w = jax.random.uniform(kw, (fan_in, fan_out), jnp.float32, -bound, bound)
        b = jax.random.uniform(kb, (1, fan_out), jnp.float32, -bound, bound)
        return w, b

    w1, b1 = linear(keys[0], keys[1], state_dim, hidden_dim)
    w2, b2 = linear(keys[2], keys[3], hidden_dim, hidden_dim)
    w3, b3 = linear(keys[4], keys[5], hidden_dim, action_dim)

    w1_p = jnp.zeros((k_pad, hidden_dim), jnp.float32).at[:state_dim, :].set(w1)
    w3_p = jnp.zeros((hidden_dim, out_pad), jnp.float32).at[:, :action_dim].set(w3)
    b3_p = jnp.zeros((1, out_pad), jnp.float32).at[:, :action_dim].set(b3)

    kernel_params = {
        "w1": w1_p.astype(jnp.bfloat16), "b1": b1,
        "w2": w2.astype(jnp.bfloat16),   "b2": b2,
        "w3": w3_p.astype(jnp.bfloat16), "b3": b3_p,
    }
    ref_params = {"w1": w1, "b1": b1, "w2": w2, "b2": b2, "w3": w3, "b3": b3}
    return kernel_params, ref_params


if __name__ == "__main__":
    # Shapes consistent with the module defaults: hidden_dim=256; state_dim=32,
    # action_dim=8; batch=256 so the batch grid (tb=128 -> 2 steps) is exercised.
    batch, state_dim, hidden_dim, action_dim = 256, 32, 256, 8

    key = jax.random.PRNGKey(0)
    pkey, xkey = jax.random.split(key)
    params, ref_params = init_params(pkey, state_dim, action_dim, hidden_dim)
    state = jax.random.normal(xkey, (batch, state_dim), jnp.float32)

    out = policy_network_forward(state, params, action_dim, tb=128)
    out = jax.block_until_ready(out)
    assert out.shape == (batch, action_dim)

    # Reference 1: original f32 module semantics (loose tol, bf16 operand rounding).
    h = jnp.maximum(state @ ref_params["w1"] + ref_params["b1"], 0.0)
    h = jnp.maximum(h @ ref_params["w2"] + ref_params["b2"], 0.0)
    ref_f32 = jnp.tanh(h @ ref_params["w3"] + ref_params["b3"])
    assert jnp.allclose(out, ref_f32, atol=5e-2, rtol=0.0), float(
        jnp.max(jnp.abs(out - ref_f32)))

    # Reference 2: same bf16-operand / f32-accumulate math in plain JAX (tight tol).
    xb = jnp.zeros((batch, params["w1"].shape[0]), jnp.bfloat16)
    xb = xb.at[:, :state_dim].set(state.astype(jnp.bfloat16))
    hb = jnp.maximum(
        jnp.dot(xb, params["w1"], preferred_element_type=jnp.float32)
        + params["b1"], 0.0)
    hb = jnp.maximum(
        jnp.dot(hb.astype(jnp.bfloat16), params["w2"],
                preferred_element_type=jnp.float32) + params["b2"], 0.0)
    ref_bf16 = jnp.tanh(
        jnp.dot(hb.astype(jnp.bfloat16), params["w3"],
                preferred_element_type=jnp.float32)
        + params["b3"])[:, :action_dim]
    assert jnp.allclose(out, ref_bf16, atol=2e-3, rtol=0.0), float(
        jnp.max(jnp.abs(out - ref_bf16)))

    print("KERNEL_OK")
</pallas_src>

<mosaic_0001>
module attributes {stable_mosaic.version = 11 : i64} {
  func.func @policy_mlp_kernel(%arg0: i32, %arg1: memref<128x128xbf16, #tpu.memory_space<vmem>>, %arg2: memref<128x256xbf16, #tpu.memory_space<vmem>>, %arg3: memref<1x256xf32, #tpu.memory_space<vmem>>, %arg4: memref<256x256xbf16, #tpu.memory_space<vmem>>, %arg5: memref<1x256xf32, #tpu.memory_space<vmem>>, %arg6: memref<256x128xbf16, #tpu.memory_space<vmem>>, %arg7: memref<1x128xf32, #tpu.memory_space<vmem>>, %arg8: memref<128x128xf32, #tpu.memory_space<vmem>>) attributes {dimension_semantics = [#tpu.dimension_semantics<parallel>], iteration_bounds = array<i64: 2>, scalar_prefetch = 0 : i64, scratch_operands = 0 : i64, tpu.core_type = #tpu.core_type<tc>, window_params = [{transform_indices = @transform_0, window_bounds = array<i64: 128, 128>}, {pipeline_mode = #tpu.pipeline_mode<synchronous>, transform_indices = @transform_1, window_bounds = array<i64: 128, 256>}, {pipeline_mode = #tpu.pipeline_mode<synchronous>, transform_indices = @transform_2, window_bounds = array<i64: 1, 256>}, {pipeline_mode = #tpu.pipeline_mode<synchronous>, transform_indices = @transform_3, window_bounds = array<i64: 256, 256>}, {pipeline_mode = #tpu.pipeline_mode<synchronous>, transform_indices = @transform_4, window_bounds = array<i64: 1, 256>}, {pipeline_mode = #tpu.pipeline_mode<synchronous>, transform_indices = @transform_5, window_bounds = array<i64: 256, 128>}, {pipeline_mode = #tpu.pipeline_mode<synchronous>, transform_indices = @transform_6, window_bounds = array<i64: 1, 128>}, {transform_indices = @transform_7, window_bounds = array<i64: 128, 128>}]} {
    %c0 = arith.constant 0 : index
    %c0_0 = arith.constant 0 : index
    %0 = vector.load %arg1[%c0, %c0_0] : memref<128x128xbf16, #tpu.memory_space<vmem>>, vector<128x128xbf16>
    %c0_1 = arith.constant 0 : index
    %c0_2 = arith.constant 0 : index
    %1 = vector.load %arg2[%c0_1, %c0_2] : memref<128x256xbf16, #tpu.memory_space<vmem>>, vector<128x256xbf16>
    %cst = arith.constant dense<0.000000e+00> : vector<128x256xf32>
    %2 = tpu.matmul %0, %1, %cst {dimension_numbers = #tpu.dot_dimension_numbers<[1], [0], [0], [1], [0, 0, 1, 1], [], []>} : vector<128x128xbf16>, vector<128x256xbf16>, vector<128x256xf32> -> vector<128x256xf32>
    %c0_3 = arith.constant 0 : index
    %c0_4 = arith.constant 0 : index
    %3 = vector.load %arg3[%c0_3, %c0_4] : memref<1x256xf32, #tpu.memory_space<vmem>>, vector<1x256xf32>
    %4 = vector.broadcast %3 : vector<1x256xf32> to vector<128x256xf32>
    %5 = arith.addf %2, %4 : vector<128x256xf32>
    %cst_5 = arith.constant 0.000000e+00 : f32
    %6 = vector.broadcast %cst_5 : f32 to vector<128x256xf32>
    %7 = arith.maximumf %5, %6 : vector<128x256xf32>
    %8 = arith.truncf %7 : vector<128x256xf32> to vector<128x256xbf16>
    %c0_6 = arith.constant 0 : index
    %c0_7 = arith.constant 0 : index
    %9 = vector.load %arg4[%c0_6, %c0_7] : memref<256x256xbf16, #tpu.memory_space<vmem>>, vector<256x256xbf16>
    %cst_8 = arith.constant dense<0.000000e+00> : vector<128x256xf32>
    %10 = tpu.matmul %8, %9, %cst_8 {dimension_numbers = #tpu.dot_dimension_numbers<[1], [0], [0], [1], [0, 0, 1, 1], [], []>} : vector<128x256xbf16>, vector<256x256xbf16>, vector<128x256xf32> -> vector<128x256xf32>
    %c0_9 = arith.constant 0 : index
    %c0_10 = arith.constant 0 : index
    %11 = vector.load %arg5[%c0_9, %c0_10] : memref<1x256xf32, #tpu.memory_space<vmem>>, vector<1x256xf32>
    %12 = vector.broadcast %11 : vector<1x256xf32> to vector<128x256xf32>
    %13 = arith.addf %10, %12 : vector<128x256xf32>
    %cst_11 = arith.constant 0.000000e+00 : f32
    %14 = vector.broadcast %cst_11 : f32 to vector<128x256xf32>
    %15 = arith.maximumf %13, %14 : vector<128x256xf32>
    %16 = arith.truncf %15 : vector<128x256xf32> to vector<128x256xbf16>
    %c0_12 = arith.constant 0 : index
    %c0_13 = arith.constant 0 : index
    %17 = vector.load %arg6[%c0_12, %c0_13] : memref<256x128xbf16, #tpu.memory_space<vmem>>, vector<256x128xbf16>
    %cst_14 = arith.constant dense<0.000000e+00> : vector<128x128xf32>
    %18 = tpu.matmul %16, %17, %cst_14 {dimension_numbers = #tpu.dot_dimension_numbers<[1], [0], [0], [1], [0, 0, 1, 1], [], []>} : vector<128x256xbf16>, vector<256x128xbf16>, vector<128x128xf32> -> vector<128x128xf32>
    %c0_15 = arith.constant 0 : index
    %c0_16 = arith.constant 0 : index
    %19 = vector.load %arg7[%c0_15, %c0_16] : memref<1x128xf32, #tpu.memory_space<vmem>>, vector<1x128xf32>
    %20 = vector.broadcast %19 : vector<1x128xf32> to vector<128x128xf32>
    %21 = arith.addf %18, %20 : vector<128x128xf32>
    %22 = math.tanh %21 : vector<128x128xf32>
    %c0_17 = arith.constant 0 : index
    %c0_18 = arith.constant 0 : index
    %23 = vector.load %arg8[%c0_17, %c0_18] : memref<128x128xf32, #tpu.memory_space<vmem>>, vector<128x128xf32>
    tpu.vector_store %arg8[%c0_17, %c0_18], %22 {strides = array<i32>} : memref<128x128xf32, #tpu.memory_space<vmem>>, vector<128x128xf32>,
    return
  }
  func.func @transform_0(%arg0: i32) -> (i32, i32) {
    %c0_i32 = arith.constant 0 : i32
    %c0_i32_0 = arith.constant 0 : i32
    return %arg0, %c0_i32 : i32, i32
  }
  func.func @transform_1(%arg0: i32) -> (i32, i32) {
    %c0_i32 = arith.constant 0 : i32
    %c0_i32_0 = arith.constant 0 : i32
    %c0_i32_1 = arith.constant 0 : i32
    return %c0_i32, %c0_i32_0 : i32, i32
  }
  func.func @transform_2(%arg0: i32) -> (i32, i32) {
    %c0_i32 = arith.constant 0 : i32
    %c0_i32_0 = arith.constant 0 : i32
    %c0_i32_1 = arith.constant 0 : i32
    return %c0_i32, %c0_i32_0 : i32, i32
  }
  func.func @transform_3(%arg0: i32) -> (i32, i32) {
    %c0_i32 = arith.constant 0 : i32
    %c0_i32_0 = arith.constant 0 : i32
    %c0_i32_1 = arith.constant 0 : i32
    return %c0_i32, %c0_i32_0 : i32, i32
  }
  func.func @transform_4(%arg0: i32) -> (i32, i32) {
    %c0_i32 = arith.constant 0 : i32
    %c0_i32_0 = arith.constant 0 : i32
    %c0_i32_1 = arith.constant 0 : i32
    return %c0_i32, %c0_i32_0 : i32, i32
  }
  func.func @transform_5(%arg0: i32) -> (i32, i32) {
    %c0_i32 = arith.constant 0 : i32
    %c0_i32_0 = arith.constant 0 : i32
    %c0_i32_1 = arith.constant 0 : i32
    return %c0_i32, %c0_i32_0 : i32, i32
  }
  func.func @transform_6(%arg0: i32) -> (i32, i32) {
    %c0_i32 = arith.constant 0 : i32
    %c0_i32_0 = arith.constant 0 : i32
    %c0_i32_1 = arith.constant 0 : i32
    return %c0_i32, %c0_i32_0 : i32, i32
  }
  func.func @transform_7(%arg0: i32) -> (i32, i32) {
    %c0_i32 = arith.constant 0 : i32
    %c0_i32_0 = arith.constant 0 : i32
    return %arg0, %c0_i32 : i32, i32
  }
}

</mosaic_0001>

<llo_original>
// kernel: tpu_custom_call.1
$region0: #{tpu_custom_call.1}
  #allocation0 [shape = 'u32[]', space=smem, size = 0x4, offset = 0x4, fixed_abs, tag = 'smem constant byte address 0x4 - core index']
  #allocation1 [shape = 'u32[144,128]{1,0:T(1,128)}', space=vmem, size = 0x12000, scoped, tag = 'internal scratch']
  %s0 = inlined_call_operand.hbm [shape: bf16[256,128], index: 0, kind: input, shape index: {}]
  %s1 = inlined_call_operand.hbm [shape: bf16[128,256], index: 1, kind: input, shape index: {}]
  %s2 = inlined_call_operand.vmem [shape: f32[1,256], index: 2, kind: input, shape index: {}]
  %s3 = inlined_call_operand.hbm [shape: bf16[256,256], index: 3, kind: input, shape index: {}]
  %s4 = inlined_call_operand.vmem [shape: f32[1,256], index: 4, kind: input, shape index: {}]
  %s5 = inlined_call_operand.hbm [shape: bf16[256,128], index: 5, kind: input, shape index: {}]
  %s6 = inlined_call_operand.vmem [shape: f32[1,128], index: 6, kind: input, shape index: {}]
  %s7 = inlined_call_operand.hbm [shape: f32[256,128], index: 7, kind: output, shape index: {}]
  %s8 = sld [smem:[#allocation0]]
  $region77: #{tpu_custom_call.1} parent=0
    _
  %s10 = ssub.s32 1, %s8
  %s11 = scalar_select 0, %s10, %s8
  $region1: #{tpu_custom_call.1} parent=0
    #allocation2 [shape = 'u8[65536]{0}', space=vmem, size = 0x10000, scoped, tag = 'input window, operand 0']
    #allocation3 [shape = 's32[2]{0}', space=sflag, size = 0x8, scoped, tag = 'scoped memory for tpu_custom_call.1']
    #allocation4 [shape = 's32[2]{0}', space=sflag, size = 0x8, scoped, tag = 'scoped memory for tpu_custom_call.1']
    #allocation5 [shape = 'u8[65536]{0}', space=vmem, size = 0x10000, scoped, tag = 'input window, operand 1, single buffered']
    #allocation6 [shape = 's32[1]{0}', space=sflag, size = 0x4, scoped, tag = 'scoped memory for tpu_custom_call.1']
    #allocation7 [shape = 'u8[131072]{0}', space=vmem, size = 0x20000, scoped, tag = 'input window, operand 3, single buffered']
    #allocation8 [shape = 'u8[65536]{0}', space=vmem, size = 0x10000, scoped, tag = 'input window, operand 5, single buffered']
    #allocation9 [shape = 's32[1]{0}', space=sflag, size = 0x4, scoped, tag = 'scoped memory for tpu_custom_call.1']
    #allocation10 [shape = 'u8[131072]{0}', space=vmem, size = 0x20000, scoped, tag = 'output window, operand 0']
    %12 = vsyncpa [#allocation3], 0
    %s13 = scalar_lea.sflag [#allocation3], 1
    %14 = vsyncpa %s13, 0
    %15 = vsyncpa [#allocation6], 0
    %16 = vsyncpa [#allocation9], 0
    %17 = vsyncpa [#allocation4], 0
    %s18 = scalar_lea.sflag [#allocation4], 1
    %19 = vsyncpa %s18, 0
    loop: start=0, step=1, limit=4
    $region2: #{tpu_custom_call.1} parent=1 // loop_pre_header
      _
    $region3: #{tpu_custom_call.1} parent=1 // loop_header
      %s21 = sphi 0, %s25
      %p22 = scmp.ge.s32.totalorder %s21, 4
      %s31 = sphi 0, %s33
      %s34 = sphi 0, %s31
      %s35 = sphi 0, %s34
      %s51 = sphi 0, %s35
      %s55 = sphi 0, %s55
      %s57 = sphi 0, %s55
      %s58 = sphi 0, %s57
      %s72 = sphi 0, %s58
      %s76 = sphi 0, %s76
      %s78 = sphi 0, %s76
      %s79 = sphi 0, %s78
      %s93 = sphi 0, %s79
      %s97 = sphi 0, %s97
      %s99 = sphi 0, %s97
      %s100 = sphi 0, %s99
      %s114 = sphi 0, %s100
      %s118 = sphi 0, %s118
      %s120 = sphi 0, %s118
      %s121 = sphi 0, %s120
      %s135 = sphi 0, %s121
      %s139 = sphi 0, %s139
      %s141 = sphi 0, %s139
      %s142 = sphi 0, %s141
      %s156 = sphi 0, %s142
      %s160 = sphi 0, %s160
      %s162 = sphi 0, %s160
      %s163 = sphi 0, %s162
      %s177 = sphi 0, %s163
      %s183 = sphi 0, %s185
      %s186 = sphi 0, %s183
      %s187 = sphi 0, %s186
      %s203 = sphi 0, %s187
    $region4: #{tpu_custom_call.1} parent=1 // loop_header_branch
      %24 = sbr.rel (%p22) target = $region8
    $region5: #{tpu_custom_call.1} parent=1 // loop_body
      %s26 = ssub.s32 %s21, 1
      %s27 = ssub.s32 %s21, 2
      %s28 = sadd.s32 %s21, 1
      %s29 = ssub.s32 %s21, %s28
      %p30 = scmp.eq.s32.totalorder %s29, 0
      %s32 = sadd.s32 %s31, 1
      %s33 = scalar_select %p30, %s31, %s32
      %p36 = pneg %p30
      %p37 = scmp.eq.s32.totalorder %s21, 1
      %p38 = por %p36, %p37
      %p39 = scmp.ne.s32.totalorder %s31, %s34
      %p40 = scmp.eq.s32.totalorder %s21, 0
      %p41 = por %p39, %p40
      %p42 = scmp.ne.s32.totalorder %s31, %s34
      %p43 = scmp.eq.s32.totalorder %s26, 1
      %p44 = por %p42, %p43
      %p45 = scmp.ne.s32.totalorder %s34, %s35
      %p46 = scmp.eq.s32.totalorder %s26, 0
      %p47 = por %p45, %p46
      %p48 = scmp.ne.s32.totalorder %s34, %s35
      %p49 = scmp.eq.s32.totalorder %s27, 1
      %p50 = por %p48, %p49
      %p52 = scmp.ne.s32.totalorder %s35, %s51
      %p53 = scmp.eq.s32.totalorder %s27, 0
      %p54 = por %p52, %p53
      %s56 = sadd.s32 %s55, 1
      %p59 = scmp.eq.s32.totalorder %s21, 1
      %p60 = scmp.ne.s32.totalorder %s55, %s57
      %p61 = scmp.eq.s32.totalorder %s21, 0
      %p62 = por %p60, %p61
      %p63 = scmp.ne.s32.totalorder %s55, %s57
      %p64 = scmp.eq.s32.totalorder %s26, 1
      %p65 = por %p63, %p64
      %p66 = scmp.ne.s32.totalorder %s57, %s58
      %p67 = scmp.eq.s32.totalorder %s26, 0
      %p68 = por %p66, %p67
      %p69 = scmp.ne.s32.totalorder %s57, %s58
      %p70 = scmp.eq.s32.totalorder %s27, 1
      %p71 = por %p69, %p70
      %p73 = scmp.ne.s32.totalorder %s58, %s72
      %p74 = scmp.eq.s32.totalorder %s27, 0
      %p75 = por %p73, %p74
      %s77 = sadd.s32 %s76, 1
      %p80 = scmp.eq.s32.totalorder %s21, 1
      %p81 = scmp.ne.s32.totalorder %s76, %s78
      %p82 = scmp.eq.s32.totalorder %s21, 0
      %p83 = por %p81, %p82
      %p84 = scmp.ne.s32.totalorder %s76, %s78
      %p85 = scmp.eq.s32.totalorder %s26, 1
      %p86 = por %p84, %p85
      %p87 = scmp.ne.s32.totalorder %s78, %s79
      %p88 = scmp.eq.s32.totalorder %s26, 0
      %p89 = por %p87, %p88
      %p90 = scmp.ne.s32.totalorder %s78, %s79
      %p91 = scmp.eq.s32.totalorder %s27, 1
      %p92 = por %p90, %p91
      %p94 = scmp.ne.s32.totalorder %s79, %s93
      %p95 = scmp.eq.s32.totalorder %s27, 0
      %p96 = por %p94, %p95
      %s98 = sadd.s32 %s97, 1
      %p101 = scmp.eq.s32.totalorder %s21, 1
      %p102 = scmp.ne.s32.totalorder %s97, %s99
      %p103 = scmp.eq.s32.totalorder %s21, 0
      %p104 = por %p102, %p103
      %p105 = scmp.ne.s32.totalorder %s97, %s99
      %p106 = scmp.eq.s32.totalorder %s26, 1
      %p107 = por %p105, %p106
      %p108 = scmp.ne.s32.totalorder %s99, %s100
      %p109 = scmp.eq.s32.totalorder %s26, 0
      %p110 = por %p108, %p109
      %p111 = scmp.ne.s32.totalorder %s99, %s100
      %p112 = scmp.eq.s32.totalorder %s27, 1
      %p113 = por %p111, %p112
      %p115 = scmp.ne.s32.totalorder %s100, %s114
      %p116 = scmp.eq.s32.totalorder %s27, 0
      %p117 = por %p115, %p116
      %s119 = sadd.s32 %s118, 1
      %p122 = scmp.eq.s32.totalorder %s21, 1
      %p123 = scmp.ne.s32.totalorder %s118, %s120
      %p124 = scmp.eq.s32.totalorder %s21, 0
      %p125 = por %p123, %p124
      %p126 = scmp.ne.s32.totalorder %s118, %s120
      %p127 = scmp.eq.s32.totalorder %s26, 1
      %p128 = por %p126, %p127
      %p129 = scmp.ne.s32.totalorder %s120, %s121
      %p130 = scmp.eq.s32.totalorder %s26, 0
      %p131 = por %p129, %p130
      %p132 = scmp.ne.s32.totalorder %s120, %s121
      %p133 = scmp.eq.s32.totalorder %s27, 1
      %p134 = por %p132, %p133
      %p136 = scmp.ne.s32.totalorder %s121, %s135
      %p137 = scmp.eq.s32.totalorder %s27, 0
      %p138 = por %p136, %p137
      %s140 = sadd.s32 %s139, 1
      %p143 = scmp.eq.s32.totalorder %s21, 1
      %p144 = scmp.ne.s32.totalorder %s139, %s141
      %p145 = scmp.eq.s32.totalorder %s21, 0
      %p146 = por %p144, %p145
      %p147 = scmp.ne.s32.totalorder %s139, %s141
      %p148 = scmp.eq.s32.totalorder %s26, 1
      %p149 = por %p147, %p148
      %p150 = scmp.ne.s32.totalorder %s141, %s142
      %p151 = scmp.eq.s32.totalorder %s26, 0
      %p152 = por %p150, %p151
      %p153 = scmp.ne.s32.totalorder %s141, %s142
      %p154 = scmp.eq.s32.totalorder %s27, 1
      %p155 = por %p153, %p154
      %p157 = scmp.ne.s32.totalorder %s142, %s156
      %p158 = scmp.eq.s32.totalorder %s27, 0
      %p159 = por %p157, %p158
      %s161 = sadd.s32 %s160, 1
      %p164 = scmp.eq.s32.totalorder %s21, 1
      %p165 = scmp.ne.s32.totalorder %s160, %s162
      %p166 = scmp.eq.s32.totalorder %s21, 0
      %p167 = por %p165, %p166
      %p168 = scmp.ne.s32.totalorder %s160, %s162
      %p169 = scmp.eq.s32.totalorder %s26, 1
      %p170 = por %p168, %p169
      %p171 = scmp.ne.s32.totalorder %s162, %s163
      %p172 = scmp.eq.s32.totalorder %s26, 0
      %p173 = por %p171, %p172
      %p174 = scmp.ne.s32.totalorder %s162, %s163
      %p175 = scmp.eq.s32.totalorder %s27, 1
      %p176 = por %p174, %p175
      %p178 = scmp.ne.s32.totalorder %s163, %s177
      %p179 = scmp.eq.s32.totalorder %s27, 0
      %p180 = por %p178, %p179
      %s181 = ssub.s32 %s21, %s28
      %p182 = scmp.eq.s32.totalorder %s181, 0
      %s184 = sadd.s32 %s183, 1
      %s185 = scalar_select %p182, %s183, %s184
      %p188 = pneg %p182
      %p189 = scmp.eq.s32.totalorder %s21, 1
      %p190 = por %p188, %p189
      %p191 = scmp.ne.s32.totalorder %s183, %s186
      %p192 = scmp.eq.s32.totalorder %s21, 0
      %p193 = por %p191, %p192
      %p194 = scmp.ne.s32.totalorder %s183, %s186
      %p195 = scmp.eq.s32.totalorder %s26, 1
      %p196 = por %p194, %p195
      %p197 = scmp.ne.s32.totalorder %s186, %s187
      %p198 = scmp.eq.s32.totalorder %s26, 0
      %p199 = por %p197, %p198
      %p200 = scmp.ne.s32.totalorder %s186, %s187
      %p201 = scmp.eq.s32.totalorder %s27, 1
      %p202 = por %p200, %p201
      %p204 = scmp.ne.s32.totalorder %s187, %s203
      %p205 = scmp.eq.s32.totalorder %s27, 0
      %p206 = por %p204, %p205
      %p207 = scmp.le.s32.totalorder 1, %s21
      %p208 = scmp.lt.s32.totalorder %s21, 3
      %p209 = pnand %p207, %p208
      %p210 = pneg %p209
      // Predicated region
      $region9: #{tpu_custom_call.1} parent=5 // pred_check
        _
      $region10: #{tpu_custom_call.1} parent=5 // pred_check_branch
        %212 = sbr.rel (%p209) target = $region12
      $region11: #{tpu_custom_call.1} parent=5 // pred_region
        %s213 = ssub.s32 %s21, 1
        // Predicated region
        $region13: #{tpu_custom_call.1} parent=11 // pred_check
          %p214 = pneg %p68
        $region14: #{tpu_custom_call.1} parent=11 // pred_check_branch
          %216 = sbr.rel (%p214) target = $region16
        $region15: #{tpu_custom_call.1} parent=11 // pred_region
          %s218 = ssub.s32 2048, 2048
          %219 = vsyncadd [#allocation6], %s218
          %s220 = sshll.u32 [#allocation5], 4
          %s221 = int_to_ptr.vmem [resolvable:$true] %s220
          %226 = dma.hbm_to_vmem [thread:$0]  %s1, 2048, %s221, [#allocation6], 128, 128, 8
        $region16: #{tpu_custom_call.1} parent=11 // pred_fallthru
          _
        // Predicated region
        $region17: #{tpu_custom_call.1} parent=11 // pred_check
          %p227 = pneg %p89
        $region18: #{tpu_custom_call.1} parent=11 // pred_check_branch
          %229 = sbr.rel (%p227) target = $region20
        $region19: #{tpu_custom_call.1} parent=11 // pred_region
          _
        $region20: #{tpu_custom_call.1} parent=11 // pred_fallthru
          _
        // Predicated region
        $region21: #{tpu_custom_call.1} parent=11 // pred_check
          %p230 = pneg %p110
        $region22: #{tpu_custom_call.1} parent=11 // pred_check_branch
          %232 = sbr.rel (%p230) target = $region24
        $region23: #{tpu_custom_call.1} parent=11 // pred_region
          %s234 = ssub.s32 4096, 4096
          %235 = vsyncadd [#allocation6], %s234
          %s236 = sshll.u32 [#allocation7], 4
          %s237 = int_to_ptr.vmem [resolvable:$true] %s236
          %242 = dma.hbm_to_vmem [thread:$0]  %s3, 4096, %s237, [#allocation6], 128, 128, 8
        $region24: #{tpu_custom_call.1} parent=11 // pred_fallthru
          _
        // Predicated region
        $region25: #{tpu_custom_call.1} parent=11 // pred_check
          %p243 = pneg %p131
        $region26: #{tpu_custom_call.1} parent=11 // pred_check_branch
          %245 = sbr.rel (%p243) target = $region28
        $region27: #{tpu_custom_call.1} parent=11 // pred_region
          _
        $region28: #{tpu_custom_call.1} parent=11 // pred_fallthru
          _
        // Predicated region
        $region29: #{tpu_custom_call.1} parent=11 // pred_check
          %p246 = pneg %p152
        $region30: #{tpu_custom_call.1} parent=11 // pred_check_branch
          %248 = sbr.rel (%p246) target = $region32
        $region31: #{tpu_custom_call.1} parent=11 // pred_region
          %s250 = ssub.s32 2048, 2048
          %251 = vsyncadd [#allocation9], %s250
          %s252 = sshll.u32 [#allocation8], 4
          %s253 = int_to_ptr.vmem [resolvable:$true] %s252
          %258 = dma.hbm_to_vmem [thread:$0]  %s5, 2048, %s253, [#allocation9], 64, 64, 4
        $region32: #{tpu_custom_call.1} parent=11 // pred_fallthru
          _
        // Predicated region
        $region33: #{tpu_custom_call.1} parent=11 // pred_check
          %p259 = pneg %p173
        $region34: #{tpu_custom_call.1} parent=11 // pred_check_branch
          %261 = sbr.rel (%p259) target = $region36
        $region35: #{tpu_custom_call.1} parent=11 // pred_region
          _
        $region36: #{tpu_custom_call.1} parent=11 // pred_fallthru
          _
      $region12: #{tpu_custom_call.1} parent=5 // pred_fallthru
        _
      %p262 = scmp.lt.s32.totalorder %s21, 2
      // Predicated region
      $region37: #{tpu_custom_call.1} parent=5 // pred_check
        %p263 = pneg %p262
      $region38: #{tpu_custom_call.1} parent=5 // pred_check_branch
        %265 = sbr.rel (%p263) target = $region40
      $region39: #{tpu_custom_call.1} parent=5 // pred_region
        // Predicated region
        $region41: #{tpu_custom_call.1} parent=39 // pred_check
          %p266 = pneg %p41
        $region42: #{tpu_custom_call.1} parent=39 // pred_check_branch
          %268 = sbr.rel (%p266) target = $region44
        $region43: #{tpu_custom_call.1} parent=39 // pred_region
          %s269 = sand.u32 %s31, 1
          %s270 = scalar_lea.sflag [#allocation3], %s269
          %s271 = sand.u32 %s31, 1
          %s272 = smul.addr %s271, 64
          %s273 = scalar_lea.vmem [#allocation2], %s272
          %s274 = smul.u32 16, %s21
          %s276 = ssub.s32 1024, 1024
          %277 = vsyncadd %s270, %s276
          %s278 = smul.addr %s274, 64
          %s279 = scalar_lea.hbm %s0, %s278
          %s280 = sshll.u32 %s273, 4
          %s281 = int_to_ptr.vmem [resolvable:$true] %s280
          %286 = dma.hbm_to_vmem [thread:$0]  %s279, 1024, %s281, %s270, 64, 64, 4
        $region44: #{tpu_custom_call.1} parent=39 // pred_fallthru
          _
      $region40: #{tpu_custom_call.1} parent=5 // pred_fallthru
        _
      %p287 = scmp.le.s32.totalorder 1, %s21
      %p288 = scmp.lt.s32.totalorder %s21, 3
      %p289 = pnand %p287, %p288
      %p290 = pneg %p289
      // Predicated region
      $region45: #{tpu_custom_call.1} parent=5 // pred_check
        _
      $region46: #{tpu_custom_call.1} parent=5 // pred_check_branch
        %292 = sbr.rel (%p289) target = $region48
      $region47: #{tpu_custom_call.1} parent=5 // pred_region
        %s293 = ssub.s32 %s21, 1
        %s294 = sand.u32 %s34, 1
        %s295 = scalar_lea.sflag [#allocation3], %s294
        %s296 = sand.u32 %s34, 1
        %s297 = smul.addr %s296, 64
        %s298 = scalar_lea.vmem [#allocation2], %s297
        // Predicated region
        $region49: #{tpu_custom_call.1} parent=47 // pred_check
          %p299 = pneg %p47
        $region50: #{tpu_custom_call.1} parent=47 // pred_check_branch
          %301 = sbr.rel (%p299) target = $region52
        $region51: #{tpu_custom_call.1} parent=47 // pred_region
          %302 = dma.done %s295, 1024
        $region52: #{tpu_custom_call.1} parent=47 // pred_fallthru
          _
        // Predicated region
        $region53: #{tpu_custom_call.1} parent=47 // pred_check
          %p303 = pneg %p68
        $region54: #{tpu_custom_call.1} parent=47 // pred_check_branch
          %305 = sbr.rel (%p303) target = $region56
        $region55: #{tpu_custom_call.1} parent=47 // pred_region
          %306 = dma.done [#allocation6], 2048
        $region56: #{tpu_custom_call.1} parent=47 // pred_fallthru
          _
        // Predicated region
        $region57: #{tpu_custom_call.1} parent=47 // pred_check
          %p307 = pneg %p110
        $region58: #{tpu_custom_call.1} parent=47 // pred_check_branch
          %309 = sbr.rel (%p307) target = $region60
        $region59: #{tpu_custom_call.1} parent=47 // pred_region
          %310 = dma.done [#allocation6], 4096
        $region60: #{tpu_custom_call.1} parent=47 // pred_fallthru
          _
        // Predicated region
        $region61: #{tpu_custom_call.1} parent=47 // pred_check
          %p311 = pneg %p152
        $region62: #{tpu_custom_call.1} parent=47 // pred_check_branch
          %313 = sbr.rel (%p311) target = $region64
        $region63: #{tpu_custom_call.1} parent=47 // pred_region
          %314 = dma.done [#allocation9], 2048
        $region64: #{tpu_custom_call.1} parent=47 // pred_fallthru
          _
        %s315 = sand.u32 %s34, 1
        %s316 = scalar_lea.sflag [#allocation3], %s315
        %s317 = sand.u32 %s34, 1
        %s318 = smul.addr %s317, 64
        %s319 = scalar_lea.vmem [#allocation2], %s318
        %p320 = pneg %p47
        %p321 = pneg %p44
        %p322 = pneg %p68
        %p323 = pneg %p65
        %p324 = pneg %p89
        %p325 = pneg %p86
        %p326 = pneg %p110
        %p327 = pneg %p107
        %p328 = pneg %p131
        %p329 = pneg %p128
        %p330 = pneg %p152
        %p331 = pneg %p149
        %p332 = pneg %p173
        %p333 = pneg %p170
        %p334 = pneg %p199
        %p335 = pneg %p196
        %s336 = sand.u32 %s186, 1
        %s337 = scalar_lea.sflag [#allocation4], %s336
        %s338 = sand.u32 %s186, 1
        %s339 = smul.addr %s338, 128
        %s340 = scalar_lea.vmem [#allocation10], %s339
        %s341 = smul.u32 16, %s26
        %s342 = smul.u32 16, %s26
        %v344 = vld [vmem:[%s298] sm:$0xf]
        %v345 = vld [vmem:[%s298 + $0x4] sm:$0xf]
        %v346 = vld [vmem:[%s298 + $0x8] sm:$0xf]
        %v347 = vld [vmem:[%s298 + $0xc] sm:$0xf]
        %v348 = vld [vmem:[%s298 + $0x10] sm:$0xf]
        %v349 = vld [vmem:[%s298 + $0x14] sm:$0xf]
        %v350 = vld [vmem:[%s298 + $0x18] sm:$0xf]
        %v351 = vld [vmem:[%s298 + $0x1c] sm:$0xf]
        %v352 = vld [vmem:[%s298 + $0x20] sm:$0xf]
        %v353 = vld [vmem:[%s298 + $0x24] sm:$0xf]
        %v354 = vld [vmem:[%s298 + $0x28] sm:$0xf]
        %v355 = vld [vmem:[%s298 + $0x2c] sm:$0xf]
        %v356 = vld [vmem:[%s298 + $0x30] sm:$0xf]
        %v357 = vld [vmem:[%s298 + $0x34] sm:$0xf]
        %v358 = vld [vmem:[%s298 + $0x38] sm:$0xf]
        %v359 = vld [vmem:[%s298 + $0x3c] sm:$0xf]
        %v360 = vld [vmem:[#allocation5] sm:$0xff]
        %v361 = vld [vmem:[#allocation5 + $0x8] sm:$0xff]
        %v362 = vld [vmem:[#allocation5 + $0x10] sm:$0xff]
        %v363 = vld [vmem:[#allocation5 + $0x18] sm:$0xff]
        %v364 = vld [vmem:[#allocation5 + $0x20] sm:$0xff]
        %v365 = vld [vmem:[#allocation5 + $0x28] sm:$0xff]
        %v366 = vld [vmem:[#allocation5 + $0x30] sm:$0xff]
        %v367 = vld [vmem:[#allocation5 + $0x38] sm:$0xff]
        %v368 = vld [vmem:[#allocation5 + $0x40] sm:$0xff]
        %v369 = vld [vmem:[#allocation5 + $0x48] sm:$0xff]
        %v370 = vld [vmem:[#allocation5 + $0x50] sm:$0xff]
        %v371 = vld [vmem:[#allocation5 + $0x58] sm:$0xff]
        %v372 = vld [vmem:[#allocation5 + $0x60] sm:$0xff]
        %v373 = vld [vmem:[#allocation5 + $0x68] sm:$0xff]
        %v374 = vld [vmem:[#allocation5 + $0x70] sm:$0xff]
        %v375 = vld [vmem:[#allocation5 + $0x78] sm:$0xff]
        %v376 = vld [vmem:[%s2] sm:$0x3]
        %v378 = vlaneseq
        %v379 = vshrl.u32 %v378, 7
        %v380 = vsub.s32 0, %v379
        %v381 = vrot.slane %v376, %v380
        %v382 = vlaneseq
        %v383 = vshrl.u32 %v382, 7
        %v384 = vsub.s32 1, %v383
        %v385 = vrot.slane %v376, %v384
        %v404 = vunpack.c.l.b16 %v344
        %v405 = vunpack.c.l.b16 %v345
        %v406 = vunpack.c.l.b16 %v346
        %v407 = vunpack.c.l.b16 %v347
        %v408 = vunpack.c.l.b16 %v348
        %v409 = vunpack.c.l.b16 %v349
        %v410 = vunpack.c.l.b16 %v350
        %v411 = vunpack.c.l.b16 %v351
        %v412 = vunpack.c.l.b16 %v352
        %v413 = vunpack.c.l.b16 %v353
        %v414 = vunpack.c.l.b16 %v354
        %v415 = vunpack.c.l.b16 %v355
        %v416 = vunpack.c.l.b16 %v356
        %v417 = vunpack.c.l.b16 %v357
        %v418 = vunpack.c.l.b16 %v358
        %v419 = vunpack.c.l.b16 %v359
        %v420 = vpack.c.b16 %v405, %v404
        %v421 = vpack.c.b16 %v407, %v406
        %v422 = vpack.c.b16 %v409, %v408
        %v423 = vpack.c.b16 %v411, %v410
        %v424 = vpack.c.b16 %v413, %v412
        %v425 = vpack.c.b16 %v415, %v414
        %v426 = vpack.c.b16 %v417, %v416
        %v427 = vpack.c.b16 %v419, %v418
        %v452 = vunpack.c.l.b16 %v360
        %v453 = vunpack.c.h.b16 %v360
        %v454 = vunpack.c.l.b16 %v361
        %v455 = vunpack.c.h.b16 %v361
        %v456 = vunpack.c.l.b16 %v362
        %v457 = vunpack.c.h.b16 %v362
        %v458 = vunpack.c.l.b16 %v363
        %v459 = vunpack.c.h.b16 %v363
        %v460 = vunpack.c.l.b16 %v364
        %v461 = vunpack.c.h.b16 %v364
        %v462 = vunpack.c.l.b16 %v365
        %v463 = vunpack.c.h.b16 %v365
        %v464 = vunpack.c.l.b16 %v366
        %v465 = vunpack.c.h.b16 %v366
        %v466 = vunpack.c.l.b16 %v367
        %v467 = vunpack.c.h.b16 %v367
        %v468 = vunpack.c.l.b16 %v368
        %v469 = vunpack.c.h.b16 %v368
        %v470 = vunpack.c.l.b16 %v369
        %v471 = vunpack.c.h.b16 %v369
        %v472 = vunpack.c.l.b16 %v370
        %v473 = vunpack.c.h.b16 %v370
        %v474 = vunpack.c.l.b16 %v371
        %v475 = vunpack.c.h.b16 %v371
        %v476 = vunpack.c.l.b16 %v372
        %v477 = vunpack.c.h.b16 %v372
        %v478 = vunpack.c.l.b16 %v373
        %v479 = vunpack.c.h.b16 %v373
        %v480 = vunpack.c.l.b16 %v374
        %v481 = vunpack.c.h.b16 %v374
        %v482 = vunpack.c.l.b16 %v375
        %v483 = vunpack.c.h.b16 %v375
        %v484 = vpack.c.b16 %v454, %v452
        %v485 = vpack.c.b16 %v455, %v453
        %v486 = vpack.c.b16 %v458, %v456
        %v487 = vpack.c.b16 %v459, %v457
        %v488 = vpack.c.b16 %v462, %v460
        %v489 = vpack.c.b16 %v463, %v461
        %v490 = vpack.c.b16 %v466, %v464
        %v491 = vpack.c.b16 %v467, %v465
        %v492 = vpack.c.b16 %v470, %v468
        %v493 = vpack.c.b16 %v471, %v469
        %v494 = vpack.c.b16 %v474, %v472
        %v495 = vpack.c.b16 %v475, %v473
        %v496 = vpack.c.b16 %v478, %v476
        %v497 = vpack.c.b16 %v479, %v477
        %v498 = vpack.c.b16 %v482, %v480
        %v499 = vpack.c.b16 %v483, %v481
        %516 = vmatprep.subr.bf16.mxu0 %v485
        %517 = vmatpush1.bf16.msra.mxu0 %v484
        %518 = vmatprep.subr.bf16.mxu0 %v487
        %519 = vmatpush1.bf16.msra.mxu0 %v486
        %520 = vmatprep.subr.bf16.mxu0 %v489
        %521 = vmatpush1.bf16.msra.mxu0 %v488
        %522 = vmatprep.subr.bf16.mxu0 %v491
        %523 = vmatpush1.bf16.msra.mxu0 %v490
        %524 = vmatprep.subr.bf16.mxu0 %v493
        %525 = vmatpush1.bf16.msra.mxu0 %v492
        %526 = vmatprep.subr.bf16.mxu0 %v495
        %527 = vmatpush1.bf16.msra.mxu0 %v494
        %528 = vmatprep.subr.bf16.mxu0 %v497
        %529 = vmatpush1.bf16.msra.mxu0 %v496
        %530 = vmatprep.subr.bf16.mxu0 %v499
        %531 = vmatpush1.bf16.msra.mxu0 %v498
        %532 = vmatprep.subr.bf16.mxu0 0
        %533 = vmatpush1.bf16.msra.mxu0 0
        %534 = vmatprep.subr.bf16.mxu0 0
        %535 = vmatpush1.bf16.msra.mxu0 0
        %536 = vmatprep.subr.bf16.mxu0 0
        %537 = vmatpush1.bf16.msra.mxu0 0
        %538 = vmatprep.subr.bf16.mxu0 0
        %539 = vmatpush1.bf16.msra.mxu0 0
        %540 = vmatprep.subr.bf16.mxu0 0
        %541 = vmatpush1.bf16.msra.mxu0 0
        %542 = vmatprep.subr.bf16.mxu0 0
        %543 = vmatpush1.bf16.msra.mxu0 0
        %544 = vmatprep.subr.bf16.mxu0 0
        %545 = vmatpush1.bf16.msra.mxu0 0
        %546 = vmatprep.subr.bf16.mxu0 0
        %547 = vmatpush1.bf16.msra.mxu0 0
        %548 = vmatprep.mubr.bf16.mxu0 0
        %549 = vmatmul.mubr.bf16.gmra.mrb[0].mxu0 %v420
        %v550 = vpop.f32.mrb[0].mxu0
        %v551 = vadd.f32 %v381, %v550
        %v552 = vpop.f32.mrb[0].mxu0
        %v553 = vadd.f32 %v385, %v552
        %v554 = vpop.f32.mrb[0].mxu0
        %v555 = vadd.f32 %v381, %v554
        %v556 = vpop.f32.mrb[0].mxu0
        %v557 = vadd.f32 %v385, %v556
        %558 = vmatprep.mubr.bf16.mxu0 0
        %559 = vmatmul.mubr.bf16.gmra.mrb[0].mxu0 %v421
        %v560 = vpop.f32.mrb[0].mxu0
        %v561 = vadd.f32 %v381, %v560
        %v562 = vpop.f32.mrb[0].mxu0
        %v563 = vadd.f32 %v385, %v562
        %v564 = vpop.f32.mrb[0].mxu0
        %v565 = vadd.f32 %v381, %v564
        %v566 = vpop.f32.mrb[0].mxu0
        %v567 = vadd.f32 %v385, %v566
        %568 = vmatprep.mubr.bf16.mxu0 0
        %569 = vmatmul.mubr.bf16.gmra.mrb[0].mxu0 %v422
        %v570 = vpop.f32.mrb[0].mxu0
        %v571 = vadd.f32 %v381, %v570
        %v572 = vpop.f32.mrb[0].mxu0
        %v573 = vadd.f32 %v385, %v572
        %v574 = vpop.f32.mrb[0].mxu0
        %v575 = vadd.f32 %v381, %v574
        %v576 = vpop.f32.mrb[0].mxu0
        %v577 = vadd.f32 %v385, %v576
        %578 = vmatprep.mubr.bf16.mxu0 0
        %579 = vmatmul.mubr.bf16.gmra.mrb[0].mxu0 %v423
        %v580 = vpop.f32.mrb[0].mxu0
        %v581 = vadd.f32 %v381, %v580
        %v582 = vpop.f32.mrb[0].mxu0
        %v583 = vadd.f32 %v385, %v582
        %v584 = vpop.f32.mrb[0].mxu0
        %v585 = vadd.f32 %v381, %v584
        %v586 = vpop.f32.mrb[0].mxu0
        %v587 = vadd.f32 %v385, %v586
        %588 = vmatprep.mubr.bf16.mxu0 0
        %589 = vmatmul.mubr.bf16.gmra.mrb[0].mxu0 %v424
        %v590 = vpop.f32.mrb[0].mxu0
        %v591 = vadd.f32 %v381, %v590
        %v592 = vpop.f32.mrb[0].mxu0
        %v593 = vadd.f32 %v385, %v592
        %v594 = vpop.f32.mrb[0].mxu0
        %v595 = vadd.f32 %v381, %v594
        %v596 = vpop.f32.mrb[0].mxu0
        %v597 = vadd.f32 %v385, %v596
        %598 = vmatprep.mubr.bf16.mxu0 0
        %599 = vmatmul.mubr.bf16.gmra.mrb[0].mxu0 %v425
        %v600 = vpop.f32.mrb[0].mxu0
        %v601 = vadd.f32 %v381, %v600
        %v602 = vpop.f32.mrb[0].mxu0
        %v603 = vadd.f32 %v385, %v602
        %v604 = vpop.f32.mrb[0].mxu0
        %v605 = vadd.f32 %v381, %v604
        %v606 = vpop.f32.mrb[0].mxu0
        %v607 = vadd.f32 %v385, %v606
        %608 = vmatprep.mubr.bf16.mxu0 0
        %609 = vmatmul.mubr.bf16.gmra.mrb[0].mxu0 %v426
        %v610 = vpop.f32.mrb[0].mxu0
        %v611 = vadd.f32 %v381, %v610
        %v612 = vpop.f32.mrb[0].mxu0
        %v613 = vadd.f32 %v385, %v612
        %v614 = vpop.f32.mrb[0].mxu0
        %v615 = vadd.f32 %v381, %v614
        %v616 = vpop.f32.mrb[0].mxu0
        %v617 = vadd.f32 %v385, %v616
        %618 = vmatprep.mubr.bf16.mxu0 0
        %619 = vmatmul.mubr.bf16.gmra.mrb[0].mxu0 %v427
        %v620 = vpop.f32.mrb[0].mxu0
        %v621 = vadd.f32 %v381, %v620
        %v622 = vpop.f32.mrb[0].mxu0
        %v623 = vadd.f32 %v385, %v622
        %v624 = vpop.f32.mrb[0].mxu0
        %v625 = vadd.f32 %v381, %v624
        %v626 = vpop.f32.mrb[0].mxu0
        %v627 = vadd.f32 %v385, %v626
        %628 = vdwg.mxu0
        %v629 = vmax.f32 %v551, 0.0
        %v630 = vmax.f32 %v553, 0.0
        %v631 = vmax.f32 %v555, 0.0
        %v632 = vmax.f32 %v557, 0.0
        %v633 = vmax.f32 %v561, 0.0
        %v634 = vmax.f32 %v563, 0.0
        %v635 = vmax.f32 %v565, 0.0
        %v636 = vmax.f32 %v567, 0.0
        %v637 = vmax.f32 %v571, 0.0
        %v638 = vmax.f32 %v573, 0.0
        %v639 = vmax.f32 %v575, 0.0
        %v640 = vmax.f32 %v577, 0.0
        %v641 = vmax.f32 %v581, 0.0
        %v642 = vmax.f32 %v583, 0.0
        %v643 = vmax.f32 %v585, 0.0
        %v644 = vmax.f32 %v587, 0.0
        %v645 = vmax.f32 %v591, 0.0
        %v646 = vmax.f32 %v593, 0.0
        %v647 = vmax.f32 %v595, 0.0
        %v648 = vmax.f32 %v597, 0.0
        %v649 = vmax.f32 %v601, 0.0
        %v650 = vmax.f32 %v603, 0.0
        %v651 = vmax.f32 %v605, 0.0
        %v652 = vmax.f32 %v607, 0.0
        %v653 = vmax.f32 %v611, 0.0
        %v654 = vmax.f32 %v613, 0.0
        %v655 = vmax.f32 %v615, 0.0
        %v656 = vmax.f32 %v617, 0.0
        %v657 = vmax.f32 %v621, 0.0
        %v658 = vmax.f32 %v623, 0.0
        %v659 = vmax.f32 %v625, 0.0
        %v660 = vmax.f32 %v627, 0.0
        %v661 = vpack.c.bf16 %v631, %v629
        %v662 = vpack.c.bf16 %v632, %v630
        %v663 = vpack.c.bf16 %v635, %v633
        %v664 = vpack.c.bf16 %v636, %v634
        %v665 = vpack.c.bf16 %v639, %v637
        %v666 = vpack.c.bf16 %v640, %v638
        %v667 = vpack.c.bf16 %v643, %v641
        %v668 = vpack.c.bf16 %v644, %v642
        %v669 = vpack.c.bf16 %v647, %v645
        %v670 = vpack.c.bf16 %v648, %v646
        %v671 = vpack.c.bf16 %v651, %v649
        %v672 = vpack.c.bf16 %v652, %v650
        %v673 = vpack.c.bf16 %v655, %v653
        %v674 = vpack.c.bf16 %v656, %v654
        %v675 = vpack.c.bf16 %v659, %v657
        %v676 = vpack.c.bf16 %v660, %v658
        %v677 = vld [vmem:[#allocation7] sm:$0xff]
        %v678 = vld [vmem:[#allocation7 + $0x8] sm:$0xff]
        %v679 = vld [vmem:[#allocation7 + $0x10] sm:$0xff]
        %v680 = vld [vmem:[#allocation7 + $0x18] sm:$0xff]
        %v681 = vld [vmem:[#allocation7 + $0x20] sm:$0xff]
        %v682 = vld [vmem:[#allocation7 + $0x28] sm:$0xff]
        %v683 = vld [vmem:[#allocation7 + $0x30] sm:$0xff]
        %v684 = vld [vmem:[#allocation7 + $0x38] sm:$0xff]
        %v685 = vld [vmem:[#allocation7 + $0x40] sm:$0xff]
        %v686 = vld [vmem:[#allocation7 + $0x48] sm:$0xff]
        %v687 = vld [vmem:[#allocation7 + $0x50] sm:$0xff]
        %v688 = vld [vmem:[#allocation7 + $0x58] sm:$0xff]
        %v689 = vld [vmem:[#allocation7 + $0x60] sm:$0xff]
        %v690 = vld [vmem:[#allocation7 + $0x68] sm:$0xff]
        %v691 = vld [vmem:[#allocation7 + $0x70] sm:$0xff]
        %v692 = vld [vmem:[#allocation7 + $0x78] sm:$0xff]
        %v693 = vld [vmem:[#allocation7 + $0x80] sm:$0xff]
        %v694 = vld [vmem:[#allocation7 + $0x88] sm:$0xff]
        %v695 = vld [vmem:[#allocation7 + $0x90] sm:$0xff]
        %v696 = vld [vmem:[#allocation7 + $0x98] sm:$0xff]
        %v697 = vld [vmem:[#allocation7 + $0xa0] sm:$0xff]
        %v698 = vld [vmem:[#allocation7 + $0xa8] sm:$0xff]
        %v699 = vld [vmem:[#allocation7 + $0xb0] sm:$0xff]
        %v700 = vld [vmem:[#allocation7 + $0xb8] sm:$0xff]
        %v701 = vld [vmem:[#allocation7 + $0xc0] sm:$0xff]
        %v702 = vld [vmem:[#allocation7 + $0xc8] sm:$0xff]
        %v703 = vld [vmem:[#allocation7 + $0xd0] sm:$0xff]
        %v704 = vld [vmem:[#allocation7 + $0xd8] sm:$0xff]
        %v705 = vld [vmem:[#allocation7 + $0xe0] sm:$0xff]
        %v706 = vld [vmem:[#allocation7 + $0xe8] sm:$0xff]
        %v707 = vld [vmem:[#allocation7 + $0xf0] sm:$0xff]
        %v708 = vld [vmem:[#allocation7 + $0xf8] sm:$0xff]
        %v709 = vld [vmem:[%s4] sm:$0x3]
        %v711 = vlaneseq
        %v712 = vshrl.u32 %v711, 7
        %v713 = vsub.s32 0, %v712
        %v714 = vrot.slane %v709, %v713
        %v715 = vlaneseq
        %v716 = vshrl.u32 %v715, 7
        %v717 = vsub.s32 1, %v716
        %v718 = vrot.slane %v709, %v717
        %v753 = vunpack.c.l.b16 %v677
        %v754 = vunpack.c.h.b16 %v677
        %v755 = vunpack.c.l.b16 %v678
        %v756 = vunpack.c.h.b16 %v678
        %v757 = vunpack.c.l.b16 %v679
        %v758 = vunpack.c.h.b16 %v679
        %v759 = vunpack.c.l.b16 %v680
        %v760 = vunpack.c.h.b16 %v680
        %v761 = vunpack.c.l.b16 %v681
        %v762 = vunpack.c.h.b16 %v681
        %v763 = vunpack.c.l.b16 %v682
        %v764 = vunpack.c.h.b16 %v682
        %v765 = vunpack.c.l.b16 %v683
        %v766 = vunpack.c.h.b16 %v683
        %v767 = vunpack.c.l.b16 %v684
        %v768 = vunpack.c.h.b16 %v684
        %v769 = vunpack.c.l.b16 %v685
        %v770 = vunpack.c.h.b16 %v685
        %v771 = vunpack.c.l.b16 %v686
        %v772 = vunpack.c.h.b16 %v686
        %v773 = vunpack.c.l.b16 %v687
        %v774 = vunpack.c.h.b16 %v687
        %v775 = vunpack.c.l.b16 %v688
        %v776 = vunpack.c.h.b16 %v688
        %v777 = vunpack.c.l.b16 %v689
        %v778 = vunpack.c.h.b16 %v689
        %v779 = vunpack.c.l.b16 %v690
        %v780 = vunpack.c.h.b16 %v690
        %v781 = vunpack.c.l.b16 %v691
        %v782 = vunpack.c.h.b16 %v691
        %v783 = vunpack.c.l.b16 %v692
        %v784 = vunpack.c.h.b16 %v692
        %v785 = vunpack.c.l.b16 %v693
        %v786 = vunpack.c.h.b16 %v693
        %v787 = vunpack.c.l.b16 %v694
        %v788 = vunpack.c.h.b16 %v694
        %v789 = vunpack.c.l.b16 %v695
        %v790 = vunpack.c.h.b16 %v695
        %v791 = vunpack.c.l.b16 %v696
        %v792 = vunpack.c.h.b16 %v696
        %v793 = vunpack.c.l.b16 %v697
        %v794 = vunpack.c.h.b16 %v697
        %v795 = vunpack.c.l.b16 %v698
        %v796 = vunpack.c.h.b16 %v698
        %v797 = vunpack.c.l.b16 %v699
        %v798 = vunpack.c.h.b16 %v699
        %v799 = vunpack.c.l.b16 %v700
        %v800 = vunpack.c.h.b16 %v700
        %v801 = vunpack.c.l.b16 %v701
        %v802 = vunpack.c.h.b16 %v701
        %v803 = vunpack.c.l.b16 %v702
        %v804 = vunpack.c.h.b16 %v702
        %v805 = vunpack.c.l.b16 %v703
        %v806 = vunpack.c.h.b16 %v703
        %v807 = vunpack.c.l.b16 %v704
        %v808 = vunpack.c.h.b16 %v704
        %v809 = vunpack.c.l.b16 %v705
        %v810 = vunpack.c.h.b16 %v705
        %v811 = vunpack.c.l.b16 %v706
        %v812 = vunpack.c.h.b16 %v706
        %v813 = vunpack.c.l.b16 %v707
        %v814 = vunpack.c.h.b16 %v707
        %v815 = vunpack.c.l.b16 %v708
        %v816 = vunpack.c.h.b16 %v708
        %v817 = vpack.c.b16 %v755, %v753
        %v818 = vpack.c.b16 %v756, %v754
        %v819 = vpack.c.b16 %v759, %v757
        %v820 = vpack.c.b16 %v760, %v758
        %v821 = vpack.c.b16 %v763, %v761
        %v822 = vpack.c.b16 %v764, %v762
        %v823 = vpack.c.b16 %v767, %v765
        %v824 = vpack.c.b16 %v768, %v766
        %v825 = vpack.c.b16 %v771, %v769
        %v826 = vpack.c.b16 %v772, %v770
        %v827 = vpack.c.b16 %v775, %v773
        %v828 = vpack.c.b16 %v776, %v774
        %v829 = vpack.c.b16 %v779, %v777
        %v830 = vpack.c.b16 %v780, %v778
        %v831 = vpack.c.b16 %v783, %v781
        %v832 = vpack.c.b16 %v784, %v782
        %v833 = vpack.c.b16 %v787, %v785
        %v834 = vpack.c.b16 %v788, %v786
        %v835 = vpack.c.b16 %v791, %v789
        %v836 = vpack.c.b16 %v792, %v790
        %v837 = vpack.c.b16 %v795, %v793
        %v838 = vpack.c.b16 %v796, %v794
        %v839 = vpack.c.b16 %v799, %v797
        %v840 = vpack.c.b16 %v800, %v798
        %v841 = vpack.c.b16 %v803, %v801
        %v842 = vpack.c.b16 %v804, %v802
        %v843 = vpack.c.b16 %v807, %v805
        %v844 = vpack.c.b16 %v808, %v806
        %v845 = vpack.c.b16 %v811, %v809
        %v846 = vpack.c.b16 %v812, %v810
        %v847 = vpack.c.b16 %v815, %v813
        %v848 = vpack.c.b16 %v816, %v814
        %881 = vmatprep.subr.bf16.mxu0 %v818
        %882 = vmatpush1.bf16.msra.mxu0 %v817
        %883 = vmatprep.subr.bf16.mxu0 %v820
        %884 = vmatpush1.bf16.msra.mxu0 %v819
        %885 = vmatprep.subr.bf16.mxu0 %v822
        %886 = vmatpush1.bf16.msra.mxu0 %v821
        %887 = vmatprep.subr.bf16.mxu0 %v824
        %888 = vmatpush1.bf16.msra.mxu0 %v823
        %889 = vmatprep.subr.bf16.mxu0 %v826
        %890 = vmatpush1.bf16.msra.mxu0 %v825
        %891 = vmatprep.subr.bf16.mxu0 %v828
        %892 = vmatpush1.bf16.msra.mxu0 %v827
        %893 = vmatprep.subr.bf16.mxu0 %v830
        %894 = vmatpush1.bf16.msra.mxu0 %v829
        %895 = vmatprep.subr.bf16.mxu0 %v832
        %896 = vmatpush1.bf16.msra.mxu0 %v831
        %897 = vmatprep.subr.bf16.mxu0 %v834
        %898 = vmatpush1.bf16.msra.mxu0 %v833
        %899 = vmatprep.subr.bf16.mxu0 %v836
        %900 = vmatpush1.bf16.msra.mxu0 %v835
        %901 = vmatprep.subr.bf16.mxu0 %v838
        %902 = vmatpush1.bf16.msra.mxu0 %v837
        %903 = vmatprep.subr.bf16.mxu0 %v840
        %904 = vmatpush1.bf16.msra.mxu0 %v839
        %905 = vmatprep.subr.bf16.mxu0 %v842
        %906 = vmatpush1.bf16.msra.mxu0 %v841
        %907 = vmatprep.subr.bf16.mxu0 %v844
        %908 = vmatpush1.bf16.msra.mxu0 %v843
        %909 = vmatprep.subr.bf16.mxu0 %v846
        %910 = vmatpush1.bf16.msra.mxu0 %v845
        %911 = vmatprep.subr.bf16.mxu0 %v848
        %912 = vmatpush1.bf16.msra.mxu0 %v847
        %913 = vmatprep.mubr.bf16.mxu0 %v662
        %914 = vmatmul.mubr.bf16.gmra.mrb[0].mxu0 %v661
        %v915 = vpop.f32.mrb[0].mxu0
        %v916 = vadd.f32 %v714, %v915
        %v917 = vpop.f32.mrb[0].mxu0
        %v918 = vadd.f32 %v718, %v917
        %v919 = vpop.f32.mrb[0].mxu0
        %v920 = vadd.f32 %v714, %v919
        %v921 = vpop.f32.mrb[0].mxu0
        %v922 = vadd.f32 %v718, %v921
        %923 = vmatprep.mubr.bf16.mxu0 %v664
        %924 = vmatmul.mubr.bf16.gmra.mrb[0].mxu0 %v663
        %v925 = vpop.f32.mrb[0].mxu0
        %v926 = vadd.f32 %v714, %v925
        %v927 = vpop.f32.mrb[0].mxu0
        %v928 = vadd.f32 %v718, %v927
        %v929 = vpop.f32.mrb[0].mxu0
        %v930 = vadd.f32 %v714, %v929
        %v931 = vpop.f32.mrb[0].mxu0
        %v932 = vadd.f32 %v718, %v931
        %933 = vmatprep.mubr.bf16.mxu0 %v666
        %934 = vmatmul.mubr.bf16.gmra.mrb[0].mxu0 %v665
        %v935 = vpop.f32.mrb[0].mxu0
        %v936 = vadd.f32 %v714, %v935
        %v937 = vpop.f32.mrb[0].mxu0
        %v938 = vadd.f32 %v718, %v937
        %v939 = vpop.f32.mrb[0].mxu0
        %v940 = vadd.f32 %v714, %v939
        %v941 = vpop.f32.mrb[0].mxu0
        %v942 = vadd.f32 %v718, %v941
        %943 = vmatprep.mubr.bf16.mxu0 %v668
        %944 = vmatmul.mubr.bf16.gmra.mrb[0].mxu0 %v667
        %v945 = vpop.f32.mrb[0].mxu0
        %v946 = vadd.f32 %v714, %v945
        %v947 = vpop.f32.mrb[0].mxu0
        %v948 = vadd.f32 %v718, %v947
        %v949 = vpop.f32.mrb[0].mxu0
        %v950 = vadd.f32 %v714, %v949
        %v951 = vpop.f32.mrb[0].mxu0
        %v952 = vadd.f32 %v718, %v951
        %953 = vmatprep.mubr.bf16.mxu0 %v670
        %954 = vmatmul.mubr.bf16.gmra.mrb[0].mxu0 %v669
        %v955 = vpop.f32.mrb[0].mxu0
        %v956 = vadd.f32 %v714, %v955
        %v957 = vpop.f32.mrb[0].mxu0
        %v958 = vadd.f32 %v718, %v957
        %v959 = vpop.f32.mrb[0].mxu0
        %v960 = vadd.f32 %v714, %v959
        %v961 = vpop.f32.mrb[0].mxu0
        %v962 = vadd.f32 %v718, %v961
        %963 = vmatprep.mubr.bf16.mxu0 %v672
        %964 = vmatmul.mubr.bf16.gmra.mrb[0].mxu0 %v671
        %v965 = vpop.f32.mrb[0].mxu0
        %v966 = vadd.f32 %v714, %v965
        %v967 = vpop.f32.mrb[0].mxu0
        %v968 = vadd.f32 %v718, %v967
        %v969 = vpop.f32.mrb[0].mxu0
        %v970 = vadd.f32 %v714, %v969
        %v971 = vpop.f32.mrb[0].mxu0
        %v972 = vadd.f32 %v718, %v971
        %973 = vmatprep.mubr.bf16.mxu0 %v674
        %974 = vmatmul.mubr.bf16.gmra.mrb[0].mxu0 %v673
        %v975 = vpop.f32.mrb[0].mxu0
        %v976 = vadd.f32 %v714, %v975
        %v977 = vpop.f32.mrb[0].mxu0
        %v978 = vadd.f32 %v718, %v977
        %v979 = vpop.f32.mrb[0].mxu0
        %v980 = vadd.f32 %v714, %v979
        %v981 = vpop.f32.mrb[0].mxu0
        %v982 = vadd.f32 %v718, %v981
        %983 = vmatprep.mubr.bf16.mxu0 %v676
        %984 = vmatmul.mubr.bf16.gmra.mrb[0].mxu0 %v675
        %v985 = vpop.f32.mrb[0].mxu0
        %v986 = vadd.f32 %v714, %v985
        %v987 = vpop.f32.mrb[0].mxu0
        %v988 = vadd.f32 %v718, %v987
        %v989 = vpop.f32.mrb[0].mxu0
        %v990 = vadd.f32 %v714, %v989
        %v991 = vpop.f32.mrb[0].mxu0
        %v992 = vadd.f32 %v718, %v991
        %993 = vdwg.mxu0
        %v994 = vmax.f32 %v916, 0.0
        %v995 = vmax.f32 %v918, 0.0
        %v996 = vmax.f32 %v920, 0.0
        %v997 = vmax.f32 %v922, 0.0
        %v998 = vmax.f32 %v926, 0.0
        %v999 = vmax.f32 %v928, 0.0
        %v1000 = vmax.f32 %v930, 0.0
        %v1001 = vmax.f32 %v932, 0.0
        %v1002 = vmax.f32 %v936, 0.0
        %v1003 = vmax.f32 %v938, 0.0
        %v1004 = vmax.f32 %v940, 0.0
        %v1005 = vmax.f32 %v942, 0.0
        %v1006 = vmax.f32 %v946, 0.0
        %v1007 = vmax.f32 %v948, 0.0
        %v1008 = vmax.f32 %v950, 0.0
        %v1009 = vmax.f32 %v952, 0.0
        %v1010 = vmax.f32 %v956, 0.0
        %v1011 = vmax.f32 %v958, 0.0
        %v1012 = vmax.f32 %v960, 0.0
        %v1013 = vmax.f32 %v962, 0.0
        %v1014 = vmax.f32 %v966, 0.0
        %v1015 = vmax.f32 %v968, 0.0
        %v1016 = vmax.f32 %v970, 0.0
        %v1017 = vmax.f32 %v972, 0.0
        %v1018 = vmax.f32 %v976, 0.0
        %v1019 = vmax.f32 %v978, 0.0
        %v1020 = vmax.f32 %v980, 0.0
        %v1021 = vmax.f32 %v982, 0.0
        %v1022 = vmax.f32 %v986, 0.0
        %v1023 = vmax.f32 %v988, 0.0
        %v1024 = vmax.f32 %v990, 0.0
        %v1025 = vmax.f32 %v992, 0.0
        %v1026 = vpack.c.bf16 %v996, %v994
        %v1027 = vpack.c.bf16 %v997, %v995
        %v1028 = vpack.c.bf16 %v1000, %v998
        %v1029 = vpack.c.bf16 %v1001, %v999
        %v1030 = vpack.c.bf16 %v1004, %v1002
        %v1031 = vpack.c.bf16 %v1005, %v1003
        %v1032 = vpack.c.bf16 %v1008, %v1006
        %v1033 = vpack.c.bf16 %v1009, %v1007
        %v1034 = vpack.c.bf16 %v1012, %v1010
        %v1035 = vpack.c.bf16 %v1013, %v1011
        %v1036 = vpack.c.bf16 %v1016, %v1014
        %v1037 = vpack.c.bf16 %v1017, %v1015
        %v1038 = vpack.c.bf16 %v1020, %v1018
        %v1039 = vpack.c.bf16 %v1021, %v1019
        %v1040 = vpack.c.bf16 %v1024, %v1022
        %v1041 = vpack.c.bf16 %v1025, %v1023
        %v1042 = vld [vmem:[#allocation8] sm:$0xf]
        %v1043 = vld [vmem:[#allocation8 + $0x4] sm:$0xf]
        %v1044 = vld [vmem:[#allocation8 + $0x8] sm:$0xf]
        %v1045 = vld [vmem:[#allocation8 + $0xc] sm:$0xf]
        %v1046 = vld [vmem:[#allocation8 + $0x10] sm:$0xf]
        %v1047 = vld [vmem:[#allocation8 + $0x14] sm:$0xf]
        %v1048 = vld [vmem:[#allocation8 + $0x18] sm:$0xf]
        %v1049 = vld [vmem:[#allocation8 + $0x1c] sm:$0xf]
        %v1050 = vld [vmem:[#allocation8 + $0x20] sm:$0xf]
        %v1051 = vld [vmem:[#allocation8 + $0x24] sm:$0xf]
        %v1052 = vld [vmem:[#allocation8 + $0x28] sm:$0xf]
        %v1053 = vld [vmem:[#allocation8 + $0x2c] sm:$0xf]
        %v1054 = vld [vmem:[#allocation8 + $0x30] sm:$0xf]
        %v1055 = vld [vmem:[#allocation8 + $0x34] sm:$0xf]
        %v1056 = vld [vmem:[#allocation8 + $0x38] sm:$0xf]
        %v1057 = vld [vmem:[#allocation8 + $0x3c] sm:$0xf]
        %v1058 = vld [vmem:[#allocation8 + $0x40] sm:$0xf]
        %v1059 = vld [vmem:[#allocation8 + $0x44] sm:$0xf]
        %v1060 = vld [vmem:[#allocation8 + $0x48] sm:$0xf]
        %v1061 = vld [vmem:[#allocation8 + $0x4c] sm:$0xf]
        %v1062 = vld [vmem:[#allocation8 + $0x50] sm:$0xf]
        %v1063 = vld [vmem:[#allocation8 + $0x54] sm:$0xf]
        %v1064 = vld [vmem:[#allocation8 + $0x58] sm:$0xf]
        %v1065 = vld [vmem:[#allocation8 + $0x5c] sm:$0xf]
        %v1066 = vld [vmem:[#allocation8 + $0x60] sm:$0xf]
        %v1067 = vld [vmem:[#allocation8 + $0x64] sm:$0xf]
        %v1068 = vld [vmem:[#allocation8 + $0x68] sm:$0xf]
        %v1069 = vld [vmem:[#allocation8 + $0x6c] sm:$0xf]
        %v1070 = vld [vmem:[#allocation8 + $0x70] sm:$0xf]
        %v1071 = vld [vmem:[#allocation8 + $0x74] sm:$0xf]
        %v1072 = vld [vmem:[#allocation8 + $0x78] sm:$0xf]
        %v1073 = vld [vmem:[#allocation8 + $0x7c] sm:$0xf]
        %v1074 = vld [vmem:[%s6] sm:$0x1]
        %v1076 = vlaneseq
        %v1077 = vshrl.u32 %v1076, 7
        %v1078 = vsub.s32 0, %v1077
        %v1079 = vrot.slane %v1074, %v1078
        %v1113 = vunpack.c.l.b16 %v1042
        %v1114 = vunpack.c.l.b16 %v1043
        %v1115 = vunpack.c.l.b16 %v1044
        %v1116 = vunpack.c.l.b16 %v1045
        %v1117 = vunpack.c.l.b16 %v1046
        %v1118 = vunpack.c.l.b16 %v1047
        %v1119 = vunpack.c.l.b16 %v1048
        %v1120 = vunpack.c.l.b16 %v1049
        %v1121 = vunpack.c.l.b16 %v1050
        %v1122 = vunpack.c.l.b16 %v1051
        %v1123 = vunpack.c.l.b16 %v1052
        %v1124 = vunpack.c.l.b16 %v1053
        %v1125 = vunpack.c.l.b16 %v1054
        %v1126 = vunpack.c.l.b16 %v1055
        %v1127 = vunpack.c.l.b16 %v1056
        %v1128 = vunpack.c.l.b16 %v1057
        %v1129 = vunpack.c.l.b16 %v1058
        %v1130 = vunpack.c.l.b16 %v1059
        %v1131 = vunpack.c.l.b16 %v1060
        %v1132 = vunpack.c.l.b16 %v1061
        %v1133 = vunpack.c.l.b16 %v1062
        %v1134 = vunpack.c.l.b16 %v1063
        %v1135 = vunpack.c.l.b16 %v1064
        %v1136 = vunpack.c.l.b16 %v1065
        %v1137 = vunpack.c.l.b16 %v1066
        %v1138 = vunpack.c.l.b16 %v1067
        %v1139 = vunpack.c.l.b16 %v1068
        %v1140 = vunpack.c.l.b16 %v1069
        %v1141 = vunpack.c.l.b16 %v1070
        %v1142 = vunpack.c.l.b16 %v1071
        %v1143 = vunpack.c.l.b16 %v1072
        %v1144 = vunpack.c.l.b16 %v1073
        %v1145 = vpack.c.b16 %v1114, %v1113
        %v1146 = vpack.c.b16 %v1116, %v1115
        %v1147 = vpack.c.b16 %v1118, %v1117
        %v1148 = vpack.c.b16 %v1120, %v1119
        %v1149 = vpack.c.b16 %v1122, %v1121
        %v1150 = vpack.c.b16 %v1124, %v1123
        %v1151 = vpack.c.b16 %v1126, %v1125
        %v1152 = vpack.c.b16 %v1128, %v1127
        %v1153 = vpack.c.b16 %v1130, %v1129
        %v1154 = vpack.c.b16 %v1132, %v1131
        %v1155 = vpack.c.b16 %v1134, %v1133
        %v1156 = vpack.c.b16 %v1136, %v1135
        %v1157 = vpack.c.b16 %v1138, %v1137
        %v1158 = vpack.c.b16 %v1140, %v1139
        %v1159 = vpack.c.b16 %v1142, %v1141
        %v1160 = vpack.c.b16 %v1144, %v1143
        %1177 = vmatprep.subr.bf16.mxu0 0
        %1178 = vmatpush1.bf16.msra.mxu0 %v1145
        %1179 = vmatprep.subr.bf16.mxu0 0
        %1180 = vmatpush1.bf16.msra.mxu0 %v1146
        %1181 = vmatprep.subr.bf16.mxu0 0
        %1182 = vmatpush1.bf16.msra.mxu0 %v1147
        %1183 = vmatprep.subr.bf16.mxu0 0
        %1184 = vmatpush1.bf16.msra.mxu0 %v1148
        %1185 = vmatprep.subr.bf16.mxu0 0
        %1186 = vmatpush1.bf16.msra.mxu0 %v1149
        %1187 = vmatprep.subr.bf16.mxu0 0
        %1188 = vmatpush1.bf16.msra.mxu0 %v1150
        %1189 = vmatprep.subr.bf16.mxu0 0
        %1190 = vmatpush1.bf16.msra.mxu0 %v1151
        %1191 = vmatprep.subr.bf16.mxu0 0
        %1192 = vmatpush1.bf16.msra.mxu0 %v1152
        %1193 = vmatprep.subr.bf16.mxu0 0
        %1194 = vmatpush1.bf16.msra.mxu0 %v1153
        %1195 = vmatprep.subr.bf16.mxu0 0
        %1196 = vmatpush1.bf16.msra.mxu0 %v1154
        %1197 = vmatprep.subr.bf16.mxu0 0
        %1198 = vmatpush1.bf16.msra.mxu0 %v1155
        %1199 = vmatprep.subr.bf16.mxu0 0
        %1200 = vmatpush1.bf16.msra.mxu0 %v1156
        %1201 = vmatprep.subr.bf16.mxu0 0
        %1202 = vmatpush1.bf16.msra.mxu0 %v1157
        %1203 = vmatprep.subr.bf16.mxu0 0
        %1204 = vmatpush1.bf16.msra.mxu0 %v1158
        %1205 = vmatprep.subr.bf16.mxu0 0
        %1206 = vmatpush1.bf16.msra.mxu0 %v1159
        %1207 = vmatprep.subr.bf16.mxu0 0
        %1208 = vmatpush1.bf16.msra.mxu0 %v1160
        %1209 = vmatprep.mubr.bf16.mxu0 %v1027
        %1210 = vmatmul.mubr.bf16.gmra.mrb[0].mxu0 %v1026
        %v1211 = vpop.f32.mrb[0].mxu0
        %v1212 = vadd.f32 %v1079, %v1211
        %v1213 = vpop.f32.mrb[0].mxu0
        %v1214 = vpop.f32.mrb[0].mxu0
        %v1215 = vadd.f32 %v1079, %v1214
        %v1216 = vpop.f32.mrb[0].mxu0
        %1217 = vmatprep.mubr.bf16.mxu0 %v1029
        %1218 = vmatmul.mubr.bf16.gmra.mrb[0].mxu0 %v1028
        %v1219 = vpop.f32.mrb[0].mxu0
        %v1220 = vadd.f32 %v1079, %v1219
        %v1221 = vpop.f32.mrb[0].mxu0
        %v1222 = vpop.f32.mrb[0].mxu0
        %v1223 = vadd.f32 %v1079, %v1222
        %v1224 = vpop.f32.mrb[0].mxu0
        %1225 = vmatprep.mubr.bf16.mxu0 %v1031
        %1226 = vmatmul.mubr.bf16.gmra.mrb[0].mxu0 %v1030
        %v1227 = vpop.f32.mrb[0].mxu0
        %v1228 = vadd.f32 %v1079, %v1227
        %v1229 = vpop.f32.mrb[0].mxu0
        %v1230 = vpop.f32.mrb[0].mxu0
        %v1231 = vadd.f32 %v1079, %v1230
        %v1232 = vpop.f32.mrb[0].mxu0
        %1233 = vmatprep.mubr.bf16.mxu0 %v1033
        %1234 = vmatmul.mubr.bf16.gmra.mrb[0].mxu0 %v1032
        %v1235 = vpop.f32.mrb[0].mxu0
        %v1236 = vadd.f32 %v1079, %v1235
        %v1237 = vpop.f32.mrb[0].mxu0
        %v1238 = vpop.f32.mrb[0].mxu0
        %v1239 = vadd.f32 %v1079, %v1238
        %v1240 = vpop.f32.mrb[0].mxu0
        %1241 = vmatprep.mubr.bf16.mxu0 %v1035
        %1242 = vmatmul.mubr.bf16.gmra.mrb[0].mxu0 %v1034
        %v1243 = vpop.f32.mrb[0].mxu0
        %v1244 = vadd.f32 %v1079, %v1243
        %v1245 = vpop.f32.mrb[0].mxu0
        %v1246 = vpop.f32.mrb[0].mxu0
        %v1247 = vadd.f32 %v1079, %v1246
        %v1248 = vpop.f32.mrb[0].mxu0
        %1249 = vmatprep.mubr.bf16.mxu0 %v1037
        %1250 = vmatmul.mubr.bf16.gmra.mrb[0].mxu0 %v1036
        %v1251 = vpop.f32.mrb[0].mxu0
        %v1252 = vadd.f32 %v1079, %v1251
        %v1253 = vpop.f32.mrb[0].mxu0
        %v1254 = vpop.f32.mrb[0].mxu0
        %v1255 = vadd.f32 %v1079, %v1254
        %v1256 = vpop.f32.mrb[0].mxu0
        %1257 = vmatprep.mubr.bf16.mxu0 %v1039
        %1258 = vmatmul.mubr.bf16.gmra.mrb[0].mxu0 %v1038
        %v1259 = vpop.f32.mrb[0].mxu0
        %v1260 = vadd.f32 %v1079, %v1259
        %v1261 = vpop.f32.mrb[0].mxu0
        %v1262 = vpop.f32.mrb[0].mxu0
        %v1263 = vadd.f32 %v1079, %v1262
        %v1264 = vpop.f32.mrb[0].mxu0
        %1265 = vmatprep.mubr.bf16.mxu0 %v1041
        %1266 = vmatmul.mubr.bf16.gmra.mrb[0].mxu0 %v1040
        %v1267 = vpop.f32.mrb[0].mxu0
        %v1268 = vadd.f32 %v1079, %v1267
        %v1269 = vpop.f32.mrb[0].mxu0
        %v1270 = vpop.f32.mrb[0].mxu0
        %v1271 = vadd.f32 %v1079, %v1270
        %v1272 = vpop.f32.mrb[0].mxu0
        %1273 = vdwg.mxu0
        %v1274 = vtanh.pop %v1212
        %v1275 = vtanh.pop %v1215
        %v1276 = vtanh.pop %v1220
        %v1277 = vtanh.pop %v1223
        %v1278 = vtanh.pop %v1228
        %v1279 = vtanh.pop %v1231
        %v1280 = vtanh.pop %v1236
        %v1281 = vtanh.pop %v1239
        %v1282 = vtanh.pop %v1244
        %v1283 = vtanh.pop %v1247
        %v1284 = vtanh.pop %v1252
        %v1285 = vtanh.pop %v1255
        %v1286 = vtanh.pop %v1260
        %v1287 = vtanh.pop %v1263
        %v1288 = vtanh.pop %v1268
        %v1289 = vtanh.pop %v1271
        %1290 = vst [vmem:[%s340] sm:$0xff] %v1274
        %1291 = vst [vmem:[%s340 + $0x8] sm:$0xff] %v1275
        %1292 = vst [vmem:[%s340 + $0x10] sm:$0xff] %v1276
        %1293 = vst [vmem:[%s340 + $0x18] sm:$0xff] %v1277
        %1294 = vst [vmem:[%s340 + $0x20] sm:$0xff] %v1278
        %1295 = vst [vmem:[%s340 + $0x28] sm:$0xff] %v1279
        %1296 = vst [vmem:[%s340 + $0x30] sm:$0xff] %v1280
        %1297 = vst [vmem:[%s340 + $0x38] sm:$0xff] %v1281
        %1298 = vst [vmem:[%s340 + $0x40] sm:$0xff] %v1282
        %1299 = vst [vmem:[%s340 + $0x48] sm:$0xff] %v1283
        %1300 = vst [vmem:[%s340 + $0x50] sm:$0xff] %v1284
        %1301 = vst [vmem:[%s340 + $0x58] sm:$0xff] %v1285
        %1302 = vst [vmem:[%s340 + $0x60] sm:$0xff] %v1286
        %1303 = vst [vmem:[%s340 + $0x68] sm:$0xff] %v1287
        %1304 = vst [vmem:[%s340 + $0x70] sm:$0xff] %v1288
        %1305 = vst [vmem:[%s340 + $0x78] sm:$0xff] %v1289
        %s1306 = sand.u32 %s186, 1
        %s1307 = scalar_lea.sflag [#allocation4], %s1306
        %s1308 = sand.u32 %s186, 1
        %s1309 = smul.addr %s1308, 128
        %s1310 = scalar_lea.vmem [#allocation10], %s1309
        // Predicated region
        $region65: #{tpu_custom_call.1} parent=47 // pred_check
          %p1311 = pneg %p196
        $region66: #{tpu_custom_call.1} parent=47 // pred_check_branch
          %1313 = sbr.rel (%p1311) target = $region68
        $region67: #{tpu_custom_call.1} parent=47 // pred_region
          %s1314 = smul.u32 16, %s26
          %s1316 = ssub.s32 2048, 2048
          %1317 = vsyncadd %s1307, %s1316
          %s1318 = smul.addr %s1314, 128
          %s1319 = scalar_lea.hbm %s7, %s1318
          %s1320 = sshll.u32 %s1310, 4
          %s1321 = int_to_ptr.vmem [resolvable:$true] %s1320
          %1326 = dma.vmem_to_hbm [thread:$0]  %s1321, 2048, %s1319, %s1307, 128, 128, 8
        $region68: #{tpu_custom_call.1} parent=47 // pred_fallthru
          _
      $region48: #{tpu_custom_call.1} parent=5 // pred_fallthru
        _
      %p1327 = scmp.le.s32.totalorder 2, %s21
      // Predicated region
      $region69: #{tpu_custom_call.1} parent=5 // pred_check
        %p1328 = pneg %p1327
      $region70: #{tpu_custom_call.1} parent=5 // pred_check_branch
        %1330 = sbr.rel (%p1328) target = $region72
      $region71: #{tpu_custom_call.1} parent=5 // pred_region
        %s1331 = ssub.s32 %s21, 2
        // Predicated region
        $region73: #{tpu_custom_call.1} parent=71 // pred_check
          %p1332 = pneg %p202
        $region74: #{tpu_custom_call.1} parent=71 // pred_check_branch
          %1334 = sbr.rel (%p1332) target = $region76
        $region75: #{tpu_custom_call.1} parent=71 // pred_region
          %s1335 = sand.u32 %s187, 1
          %s1336 = scalar_lea.sflag [#allocation4], %s1335
          %s1337 = sand.u32 %s187, 1
          %s1338 = smul.addr %s1337, 128
          %s1339 = scalar_lea.vmem [#allocation10], %s1338
          %1340 = dma.done %s1336, 2048
        $region76: #{tpu_custom_call.1} parent=71 // pred_fallthru
          _
      $region72: #{tpu_custom_call.1} parent=5 // pred_fallthru
        _
    $region6: #{tpu_custom_call.1} parent=1 // loop_footer
      %s25 = sadd.s32 1, %s21
    $region7: #{tpu_custom_call.1} parent=1 // loop_footer_branch
      %20 = sbr.rel target = $region3
    $region8: #{tpu_custom_call.1} parent=1 // loop_exit
      _
    %1341 = vsyncpa [#allocation3], 1
    %s1342 = scalar_lea.sflag [#allocation3], 1
    %1343 = vsyncpa %s1342, 1
    %1344 = vsyncpa [#allocation6], 1
    %1345 = vsyncpa [#allocation9], 1
    %1346 = vsyncpa [#allocation4], 1
    %s1347 = scalar_lea.sflag [#allocation4], 1
    %1348 = vsyncpa %s1347, 1

</llo_original>
